<compile_context>
chip_gen: v7x
topology: tpu7x:2x2x1
jax: 0.10.0
libtpu: 0.0.40
codegen_flags: <defaults>
</compile_context>

<pallas_src>
import functools

import jax
import jax.numpy as jnp
from jax.experimental import pallas as pl
from jax.experimental.pallas import tpu as pltpu

_VMEM = pl.BlockSpec(memory_space=pltpu.MemorySpace.VMEM)
_LANE = 128     # TPU lane width
_SUB = 8        # TPU sublane width
_NEG = -1e30    # Python float (a jnp array here would be captured as a kernel const)


def _rup(n, m):
    return ((n + m - 1) // m) * m


def _leaky(y):
    # nn.LeakyReLU default negative_slope = 0.01 (f32 epilogue)
    return jnp.where(y > 0, y, 0.01 * y)


def _pad2(x, rows, cols):
    return jnp.pad(x, ((0, rows - x.shape[0]), (0, cols - x.shape[1])))


# ---------------------------------------------------------------------------
# Single fused kernel: SAGE stack -> masked max onto 'net' nodes -> MLP head.
# ---------------------------------------------------------------------------
def _vagnn_kernel(meta, a_ref, m_ref, x_ref, w_ref, b_ref, o_ref):
    gnn_meta, mlp_meta = meta

    a = a_ref[...]                       # [Nlp, Nlp] f32 row-mean adjacency
    xx = x_ref[...]                      # [Nlp, Dp]  bf16 node features
    xx_f32 = xx.astype(jnp.float32)

    # ---- SAGEConv('mean') stack, LeakyReLU fused --------------------------
    # One f32 adjacency contraction + ONE fused bf16 MXU dot per layer:
    #   concat([x, A@x]) @ [W_self; W_neigh]  ==  x@W_self + (A@x)@W_neigh
    # TODO(synk): nn.Dropout(0.5) / SAGEConv feat_drop=0.5 are identity here
    #             (eval-mode semantics); stochastic dropout not emitted.
    for (koff, din_p, dout_p, brow) in gnn_meta:
        ax = jnp.dot(a, xx_f32, preferred_element_type=jnp.float32)     # [Nlp, din_p]
        inp = jnp.concatenate([xx, ax.astype(jnp.bfloat16)], axis=1)    # [Nlp, 2*din_p]
        w = w_ref[koff:koff + 2 * din_p, :dout_p]                       # free static slice
        b = b_ref[brow:brow + 1, :dout_p]
        z = jnp.dot(inp, w, preferred_element_type=jnp.float32) + b
        xx_f32 = _leaky(z)                                              # f32 epilogue
        xx = xx_f32.astype(jnp.bfloat16)                                # bf16 for next MXU pass

    # ---- fn.copy_u + fn.max over 'conn' edges ------------------------------
    # hsplit -> per-half max -> concat over the SAME mask == one max over the
    # full contiguous feature width.  deg/mask hoisted out of the loop; running
    # max kept as 2-D VALU updates (no 3-D temp, no sublane/XLU reduce).
    m = m_ref[...]                                   # [Nnp, Nlp] f32 0/1 incidence
    n_net_p, n_lv0_p = m.shape
    d_p = xx_f32.shape[1]
    deg = jnp.sum(m, axis=1, keepdims=True)          # one row-reduce, outside loop
    running = jnp.full((n_net_p, d_p), _NEG, jnp.float32)
    # TODO(synk): at realistic N_lv0 convert this static loop to lax.fori_loop /
    #             a grid axis (vreg live-range + compile-time guard).
    for r in range(n_lv0_p):
        m_col = m[:, r:r + 1]                        # [Nnp, 1]
        x_row = xx_f32[r:r + 1, :]                   # [1, Dp]
        running = jnp.maximum(running, jnp.where(m_col > 0, x_row, _NEG))
    y = jnp.where(deg > 0, running, 0.0)             # DGL: no in-edge -> 0

    # ---- MLP head -----------------------------------------------------------
    h = y.astype(jnp.bfloat16)
    n_mlp = len(mlp_meta)
    for i, (koff, din_p, dout_p, brow) in enumerate(mlp_meta):
        w = w_ref[koff:koff + din_p, :dout_p]
        z = jnp.dot(h, w, preferred_element_type=jnp.float32) + b_ref[brow:brow + 1, :dout_p]
        if i + 1 < n_mlp:
            h = _leaky(z).astype(jnp.bfloat16)
        else:
            o_ref[...] = jnp.tanh(z)                 # EUP tanh, lane-dense f32 store


# ---------------------------------------------------------------------------
# Parameters
# ---------------------------------------------------------------------------
def init_params(key, gnn_dims, mlp_dims):
    assert gnn_dims[-1] == mlp_dims[0]
    params = {"gnn": [], "mlp": []}
    for i in range(len(gnn_dims) - 1):
        key, k1, k2, k3 = jax.random.split(key, 4)
        din, dout = gnn_dims[i], gnn_dims[i + 1]
        params["gnn"].append(
            dict(
                w_self=jax.random.normal(k1, (din, dout), jnp.float32) * 0.1,
                w_neigh=jax.random.normal(k2, (din, dout), jnp.float32) * 0.1,
                b=jax.random.normal(k3, (1, dout), jnp.float32) * 0.01,
            )
        )
    for i in range(len(mlp_dims) - 1):
        key, k1, k2 = jax.random.split(key, 3)
        din, dout = mlp_dims[i], mlp_dims[i + 1]
        params["mlp"].append(
            dict(
                w=jax.random.normal(k1, (din, dout), jnp.float32) * 0.1,
                b=jax.random.normal(k2, (1, dout), jnp.float32) * 0.01,
            )
        )
    return params


# ---------------------------------------------------------------------------
# One-time host-side packing (hoisted out of the per-call path)
# ---------------------------------------------------------------------------
def pack_params(params):
    """Pad/cast/stack all weights into one bf16 slab and all biases into one f32
    slab; return static per-layer slice metadata (hashable nested tuples)."""
    wmax = _LANE
    for layer in params["gnn"]:
        wmax = max(wmax, _rup(layer["w_self"].shape[1], _LANE))
    for layer in params["mlp"]:
        wmax = max(wmax, _rup(layer["w"].shape[1], _LANE))

    w_blocks, b_rows = [], []
    gnn_meta, mlp_meta = [], []
    koff, brow = 0, 0
    for layer in params["gnn"]:
        din, dout = layer["w_self"].shape
        din_p, dout_p = _rup(din, _LANE), _rup(dout, _LANE)
        ws = _pad2(layer["w_self"], din_p, wmax)
        wn = _pad2(layer["w_neigh"], din_p, wmax)
        # stack along the contraction axis: concat([x, A@x]) @ [Ws; Wn]
        w_blocks.append(jnp.concatenate([ws, wn], axis=0).astype(jnp.bfloat16))
        b_rows.append(_pad2(layer["b"], 1, wmax).astype(jnp.float32))
        gnn_meta.append((koff, din_p, dout_p, brow))
        koff += 2 * din_p
        brow += 1
    for layer in params["mlp"]:
        din, dout = layer["w"].shape
        din_p, dout_p = _rup(din, _LANE), _rup(dout, _LANE)
        w_blocks.append(_pad2(layer["w"], din_p, wmax).astype(jnp.bfloat16))
        b_rows.append(_pad2(layer["b"], 1, wmax).astype(jnp.float32))
        mlp_meta.append((koff, din_p, dout_p, brow))
        koff += din_p
        brow += 1

    w_slab = jnp.concatenate(w_blocks, axis=0)       # [K_total, wmax] bf16
    b_slab = jnp.concatenate(b_rows, axis=0)         # [n_layers, wmax] f32
    meta = (tuple(gnn_meta), tuple(mlp_meta))
    d_out = params["mlp"][-1]["w"].shape[1]
    return w_slab, b_slab, meta, d_out


def pack_graph(a_lv0, m_conn):
    """Zero-pad node axes to sublane multiples; A/M stay f32 (accuracy free,
    and avoids bf16 compares in the aggregation on v5e)."""
    n_lv0_p = _rup(a_lv0.shape[0], _SUB)
    n_net_p = _rup(m_conn.shape[0], _SUB)
    a_p = _pad2(a_lv0, n_lv0_p, n_lv0_p).astype(jnp.float32)
    m_p = _pad2(m_conn, n_net_p, n_lv0_p).astype(jnp.float32)
    return a_p, m_p


# ---------------------------------------------------------------------------
# Forward wrapper (mirrors VaGNN.forward), jitted so X padding / output slice fold
# ---------------------------------------------------------------------------
@functools.partial(jax.jit, static_argnames=("meta", "dims"))
def vagnn_forward(a_p, m_p, x, w_slab, b_slab, *, meta, dims):
    n_net, d_out = dims
    n_lv0_p = a_p.shape[0]
    n_net_p = m_p.shape[0]
    d_in_p = _rup(x.shape[1], _LANE)
    d_out_p = _rup(d_out, _LANE)

    x_p = _pad2(x, n_lv0_p, d_in_p).astype(jnp.bfloat16)

    out_p = pl.pallas_call(
        functools.partial(_vagnn_kernel, meta),
        out_shape=jax.ShapeDtypeStruct((n_net_p, d_out_p), jnp.float32),
        in_specs=[_VMEM] * 5,
        out_specs=_VMEM,
    )(a_p, m_p, x_p, w_slab, b_slab)
    return out_p[:n_net, :d_out]


if __name__ == "__main__":
    gnn_dims = [8, 16, 16]
    mlp_dims = [16, 32, 8]
    N_LV0, N_NET = 16, 8

    key = jax.random.PRNGKey(0)
    key, kx, kp = jax.random.split(key, 3)
    X = jax.random.normal(kx, (N_LV0, gnn_dims[0]), jnp.float32)
    params = init_params(kp, gnn_dims, mlp_dims)

    # deterministic ('lv0','to','lv0') ring graph, mean-normalized adjacency
    idx = jnp.arange(N_LV0)
    A = jnp.zeros((N_LV0, N_LV0), jnp.float32)
    A = A.at[idx, (idx + 1) % N_LV0].set(1.0)
    A = A.at[idx, (idx - 1) % N_LV0].set(1.0)
    deg = jnp.maximum(A.sum(axis=1, keepdims=True), 1.0)
    A_mean = A / deg

    # deterministic ('lv0','conn','net') edges: lv0 node i -> net node (i % N_NET)
    M = jnp.zeros((N_NET, N_LV0), jnp.float32)
    M = M.at[idx % N_NET, idx].set(1.0)

    # one-time packing (not on the per-call path)
    w_slab, b_slab, meta, d_out = pack_params(params)
    a_p, m_p = pack_graph(A_mean, M)

    out = vagnn_forward(a_p, m_p, X, w_slab, b_slab, meta=meta, dims=(N_NET, d_out))
    out = jax.block_until_ready(out)
    assert out.shape == (N_NET, mlp_dims[-1]), out.shape
    print("KERNEL_OK")
</pallas_src>

<mosaic_0001>
module attributes {stable_mosaic.version = 11 : i64} {
  func.func @_vagnn_kernel(%arg0: memref<16x16xf32, #tpu.memory_space<vmem>>, %arg1: memref<8x16xf32, #tpu.memory_space<vmem>>, %arg2: memref<16x128xbf16, #tpu.memory_space<vmem>>, %arg3: memref<768x128xbf16, #tpu.memory_space<vmem>>, %arg4: memref<4x128xf32, #tpu.memory_space<vmem>>, %arg5: memref<8x128xf32, #tpu.memory_space<vmem>>) attributes {dimension_semantics = [], scalar_prefetch = 0 : i64, scratch_operands = 0 : i64, tpu.core_type = #tpu.core_type<tc>} {
    %c0 = arith.constant 0 : index
    %c0_0 = arith.constant 0 : index
    %0 = vector.load %arg0[%c0, %c0_0] : memref<16x16xf32, #tpu.memory_space<vmem>>, vector<16x16xf32>
    %c0_1 = arith.constant 0 : index
    %c0_2 = arith.constant 0 : index
    %1 = vector.load %arg2[%c0_1, %c0_2] : memref<16x128xbf16, #tpu.memory_space<vmem>>, vector<16x128xbf16>
    %2 = arith.extf %1 : vector<16x128xbf16> to vector<16x128xf32>
    %cst = arith.constant dense<0.000000e+00> : vector<16x128xf32>
    %3 = tpu.matmul %0, %2, %cst {dimension_numbers = #tpu.dot_dimension_numbers<[1], [0], [0], [1], [0, 0, 1, 1], [], []>} : vector<16x16xf32>, vector<16x128xf32>, vector<16x128xf32> -> vector<16x128xf32>
    %4 = arith.truncf %3 : vector<16x128xf32> to vector<16x128xbf16>
    %5 = tpu.concatenate %1, %4 in 1 : vector<16x128xbf16>, vector<16x128xbf16> -> vector<16x256xbf16>
    %c0_3 = arith.constant 0 : index
    %c0_4 = arith.constant 0 : index
    %6 = vector.load %arg3[%c0_3, %c0_4] : memref<768x128xbf16, #tpu.memory_space<vmem>>, vector<256x128xbf16>
    %c0_5 = arith.constant 0 : index
    %c0_6 = arith.constant 0 : index
    %7 = vector.load %arg4[%c0_5, %c0_6] : memref<4x128xf32, #tpu.memory_space<vmem>>, vector<1x128xf32>
    %cst_7 = arith.constant dense<0.000000e+00> : vector<16x128xf32>
    %8 = tpu.matmul %5, %6, %cst_7 {dimension_numbers = #tpu.dot_dimension_numbers<[1], [0], [0], [1], [0, 0, 1, 1], [], []>} : vector<16x256xbf16>, vector<256x128xbf16>, vector<16x128xf32> -> vector<16x128xf32>
    %9 = vector.broadcast %7 : vector<1x128xf32> to vector<16x128xf32>
    %10 = arith.addf %8, %9 : vector<16x128xf32>
    %cst_8 = arith.constant 0.000000e+00 : f32
    %11 = vector.broadcast %cst_8 : f32 to vector<16x128xf32>
    %12 = arith.cmpf ogt, %10, %11 : vector<16x128xf32>
    %cst_9 = arith.constant 0.00999999977 : f32
    %13 = vector.broadcast %cst_9 : f32 to vector<16x128xf32>
    %14 = arith.mulf %13, %10 : vector<16x128xf32>
    %15 = arith.select %12, %10, %14 : vector<16x128xi1>, vector<16x128xf32>
    %16 = arith.truncf %15 : vector<16x128xf32> to vector<16x128xbf16>
    %cst_10 = arith.constant dense<0.000000e+00> : vector<16x128xf32>
    %17 = tpu.matmul %0, %15, %cst_10 {dimension_numbers = #tpu.dot_dimension_numbers<[1], [0], [0], [1], [0, 0, 1, 1], [], []>} : vector<16x16xf32>, vector<16x128xf32>, vector<16x128xf32> -> vector<16x128xf32>
    %18 = arith.truncf %17 : vector<16x128xf32> to vector<16x128xbf16>
    %19 = tpu.concatenate %16, %18 in 1 : vector<16x128xbf16>, vector<16x128xbf16> -> vector<16x256xbf16>
    %c256 = arith.constant 256 : index
    %c0_11 = arith.constant 0 : index
    %20 = vector.load %arg3[%c256, %c0_11] : memref<768x128xbf16, #tpu.memory_space<vmem>>, vector<256x128xbf16>
    %c1 = arith.constant 1 : index
    %c0_12 = arith.constant 0 : index
    %21 = vector.load %arg4[%c1, %c0_12] : memref<4x128xf32, #tpu.memory_space<vmem>>, vector<1x128xf32>
    %cst_13 = arith.constant dense<0.000000e+00> : vector<16x128xf32>
    %22 = tpu.matmul %19, %20, %cst_13 {dimension_numbers = #tpu.dot_dimension_numbers<[1], [0], [0], [1], [0, 0, 1, 1], [], []>} : vector<16x256xbf16>, vector<256x128xbf16>, vector<16x128xf32> -> vector<16x128xf32>
    %23 = vector.broadcast %21 : vector<1x128xf32> to vector<16x128xf32>
    %24 = arith.addf %22, %23 : vector<16x128xf32>
    %cst_14 = arith.constant 0.000000e+00 : f32
    %25 = vector.broadcast %cst_14 : f32 to vector<16x128xf32>
    %26 = arith.cmpf ogt, %24, %25 : vector<16x128xf32>
    %cst_15 = arith.constant 0.00999999977 : f32
    %27 = vector.broadcast %cst_15 : f32 to vector<16x128xf32>
    %28 = arith.mulf %27, %24 : vector<16x128xf32>
    %29 = arith.select %26, %24, %28 : vector<16x128xi1>, vector<16x128xf32>
    %c0_16 = arith.constant 0 : index
    %c0_17 = arith.constant 0 : index
    %30 = vector.load %arg1[%c0_16, %c0_17] : memref<8x16xf32, #tpu.memory_space<vmem>>, vector<8x16xf32>
    %cst_18 = arith.constant dense<0.000000e+00> : vector<8xf32>
    %31 = vector.multi_reduction <add>, %30, %cst_18 [1] : vector<8x16xf32> to vector<8xf32>
    %32 = vector.shape_cast %31 : vector<8xf32> to vector<8x1xf32>
    %cst_19 = arith.constant -1.000000e+30 : f32
    %33 = vector.broadcast %cst_19 : f32 to vector<8x128xf32>
    %34 = vector.extract_strided_slice %30 {offsets = [0, 0], sizes = [8, 1], strides = [1, 1]} : vector<8x16xf32> to vector<8x1xf32>
    %35 = vector.extract_strided_slice %29 {offsets = [0, 0], sizes = [1, 128], strides = [1, 1]} : vector<16x128xf32> to vector<1x128xf32>
    %cst_20 = arith.constant 0.000000e+00 : f32
    %36 = vector.broadcast %cst_20 : f32 to vector<8x1xf32>
    %37 = arith.cmpf ogt, %34, %36 : vector<8x1xf32>
    %cst_21 = arith.constant -1.000000e+30 : f32
    %38 = vector.shape_cast %37 : vector<8x1xi1> to vector<8x1xi1>
    %39 = vector.broadcast %38 : vector<8x1xi1> to vector<8x128xi1>
    %40 = vector.shape_cast %35 : vector<1x128xf32> to vector<1x128xf32>
    %41 = vector.broadcast %40 : vector<1x128xf32> to vector<8x128xf32>
    %42 = vector.broadcast %cst_21 : f32 to vector<8x128xf32>
    %43 = arith.select %39, %41, %42 : vector<8x128xi1>, vector<8x128xf32>
    %44 = arith.maximumf %33, %43 : vector<8x128xf32>
    %45 = vector.extract_strided_slice %30 {offsets = [0, 1], sizes = [8, 1], strides = [1, 1]} : vector<8x16xf32> to vector<8x1xf32>
    %46 = vector.extract_strided_slice %29 {offsets = [1, 0], sizes = [1, 128], strides = [1, 1]} : vector<16x128xf32> to vector<1x128xf32>
    %cst_22 = arith.constant 0.000000e+00 : f32
    %47 = vector.broadcast %cst_22 : f32 to vector<8x1xf32>
    %48 = arith.cmpf ogt, %45, %47 : vector<8x1xf32>
    %cst_23 = arith.constant -1.000000e+30 : f32
    %49 = vector.shape_cast %48 : vector<8x1xi1> to vector<8x1xi1>
    %50 = vector.broadcast %49 : vector<8x1xi1> to vector<8x128xi1>
    %51 = vector.shape_cast %46 : vector<1x128xf32> to vector<1x128xf32>
    %52 = vector.broadcast %51 : vector<1x128xf32> to vector<8x128xf32>
    %53 = vector.broadcast %cst_23 : f32 to vector<8x128xf32>
    %54 = arith.select %50, %52, %53 : vector<8x128xi1>, vector<8x128xf32>
    %55 = arith.maximumf %44, %54 : vector<8x128xf32>
    %56 = vector.extract_strided_slice %30 {offsets = [0, 2], sizes = [8, 1], strides = [1, 1]} : vector<8x16xf32> to vector<8x1xf32>
    %57 = vector.extract_strided_slice %29 {offsets = [2, 0], sizes = [1, 128], strides = [1, 1]} : vector<16x128xf32> to vector<1x128xf32>
    %cst_24 = arith.constant 0.000000e+00 : f32
    %58 = vector.broadcast %cst_24 : f32 to vector<8x1xf32>
    %59 = arith.cmpf ogt, %56, %58 : vector<8x1xf32>
    %cst_25 = arith.constant -1.000000e+30 : f32
    %60 = vector.shape_cast %59 : vector<8x1xi1> to vector<8x1xi1>
    %61 = vector.broadcast %60 : vector<8x1xi1> to vector<8x128xi1>
    %62 = vector.shape_cast %57 : vector<1x128xf32> to vector<1x128xf32>
    %63 = vector.broadcast %62 : vector<1x128xf32> to vector<8x128xf32>
    %64 = vector.broadcast %cst_25 : f32 to vector<8x128xf32>
    %65 = arith.select %61, %63, %64 : vector<8x128xi1>, vector<8x128xf32>
    %66 = arith.maximumf %55, %65 : vector<8x128xf32>
    %67 = vector.extract_strided_slice %30 {offsets = [0, 3], sizes = [8, 1], strides = [1, 1]} : vector<8x16xf32> to vector<8x1xf32>
    %68 = vector.extract_strided_slice %29 {offsets = [3, 0], sizes = [1, 128], strides = [1, 1]} : vector<16x128xf32> to vector<1x128xf32>
    %cst_26 = arith.constant 0.000000e+00 : f32
    %69 = vector.broadcast %cst_26 : f32 to vector<8x1xf32>
    %70 = arith.cmpf ogt, %67, %69 : vector<8x1xf32>
    %cst_27 = arith.constant -1.000000e+30 : f32
    %71 = vector.shape_cast %70 : vector<8x1xi1> to vector<8x1xi1>
    %72 = vector.broadcast %71 : vector<8x1xi1> to vector<8x128xi1>
    %73 = vector.shape_cast %68 : vector<1x128xf32> to vector<1x128xf32>
    %74 = vector.broadcast %73 : vector<1x128xf32> to vector<8x128xf32>
    %75 = vector.broadcast %cst_27 : f32 to vector<8x128xf32>
    %76 = arith.select %72, %74, %75 : vector<8x128xi1>, vector<8x128xf32>
    %77 = arith.maximumf %66, %76 : vector<8x128xf32>
    %78 = vector.extract_strided_slice %30 {offsets = [0, 4], sizes = [8, 1], strides = [1, 1]} : vector<8x16xf32> to vector<8x1xf32>
    %79 = vector.extract_strided_slice %29 {offsets = [4, 0], sizes = [1, 128], strides = [1, 1]} : vector<16x128xf32> to vector<1x128xf32>
    %cst_28 = arith.constant 0.000000e+00 : f32
    %80 = vector.broadcast %cst_28 : f32 to vector<8x1xf32>
    %81 = arith.cmpf ogt, %78, %80 : vector<8x1xf32>
    %cst_29 = arith.constant -1.000000e+30 : f32
    %82 = vector.shape_cast %81 : vector<8x1xi1> to vector<8x1xi1>
    %83 = vector.broadcast %82 : vector<8x1xi1> to vector<8x128xi1>
    %84 = vector.shape_cast %79 : vector<1x128xf32> to vector<1x128xf32>
    %85 = vector.broadcast %84 : vector<1x128xf32> to vector<8x128xf32>
    %86 = vector.broadcast %cst_29 : f32 to vector<8x128xf32>
    %87 = arith.select %83, %85, %86 : vector<8x128xi1>, vector<8x128xf32>
    %88 = arith.maximumf %77, %87 : vector<8x128xf32>
    %89 = vector.extract_strided_slice %30 {offsets = [0, 5], sizes = [8, 1], strides = [1, 1]} : vector<8x16xf32> to vector<8x1xf32>
    %90 = vector.extract_strided_slice %29 {offsets = [5, 0], sizes = [1, 128], strides = [1, 1]} : vector<16x128xf32> to vector<1x128xf32>
    %cst_30 = arith.constant 0.000000e+00 : f32
    %91 = vector.broadcast %cst_30 : f32 to vector<8x1xf32>
    %92 = arith.cmpf ogt, %89, %91 : vector<8x1xf32>
    %cst_31 = arith.constant -1.000000e+30 : f32
    %93 = vector.shape_cast %92 : vector<8x1xi1> to vector<8x1xi1>
    %94 = vector.broadcast %93 : vector<8x1xi1> to vector<8x128xi1>
    %95 = vector.shape_cast %90 : vector<1x128xf32> to vector<1x128xf32>
    %96 = vector.broadcast %95 : vector<1x128xf32> to vector<8x128xf32>
    %97 = vector.broadcast %cst_31 : f32 to vector<8x128xf32>
    %98 = arith.select %94, %96, %97 : vector<8x128xi1>, vector<8x128xf32>
    %99 = arith.maximumf %88, %98 : vector<8x128xf32>
    %100 = vector.extract_strided_slice %30 {offsets = [0, 6], sizes = [8, 1], strides = [1, 1]} : vector<8x16xf32> to vector<8x1xf32>
    %101 = vector.extract_strided_slice %29 {offsets = [6, 0], sizes = [1, 128], strides = [1, 1]} : vector<16x128xf32> to vector<1x128xf32>
    %cst_32 = arith.constant 0.000000e+00 : f32
    %102 = vector.broadcast %cst_32 : f32 to vector<8x1xf32>
    %103 = arith.cmpf ogt, %100, %102 : vector<8x1xf32>
    %cst_33 = arith.constant -1.000000e+30 : f32
    %104 = vector.shape_cast %103 : vector<8x1xi1> to vector<8x1xi1>
    %105 = vector.broadcast %104 : vector<8x1xi1> to vector<8x128xi1>
    %106 = vector.shape_cast %101 : vector<1x128xf32> to vector<1x128xf32>
    %107 = vector.broadcast %106 : vector<1x128xf32> to vector<8x128xf32>
    %108 = vector.broadcast %cst_33 : f32 to vector<8x128xf32>
    %109 = arith.select %105, %107, %108 : vector<8x128xi1>, vector<8x128xf32>
    %110 = arith.maximumf %99, %109 : vector<8x128xf32>
    %111 = vector.extract_strided_slice %30 {offsets = [0, 7], sizes = [8, 1], strides = [1, 1]} : vector<8x16xf32> to vector<8x1xf32>
    %112 = vector.extract_strided_slice %29 {offsets = [7, 0], sizes = [1, 128], strides = [1, 1]} : vector<16x128xf32> to vector<1x128xf32>
    %cst_34 = arith.constant 0.000000e+00 : f32
    %113 = vector.broadcast %cst_34 : f32 to vector<8x1xf32>
    %114 = arith.cmpf ogt, %111, %113 : vector<8x1xf32>
    %cst_35 = arith.constant -1.000000e+30 : f32
    %115 = vector.shape_cast %114 : vector<8x1xi1> to vector<8x1xi1>
    %116 = vector.broadcast %115 : vector<8x1xi1> to vector<8x128xi1>
    %117 = vector.shape_cast %112 : vector<1x128xf32> to vector<1x128xf32>
    %118 = vector.broadcast %117 : vector<1x128xf32> to vector<8x128xf32>
    %119 = vector.broadcast %cst_35 : f32 to vector<8x128xf32>
    %120 = arith.select %116, %118, %119 : vector<8x128xi1>, vector<8x128xf32>
    %121 = arith.maximumf %110, %120 : vector<8x128xf32>
    %122 = vector.extract_strided_slice %30 {offsets = [0, 8], sizes = [8, 1], strides = [1, 1]} : vector<8x16xf32> to vector<8x1xf32>
    %123 = vector.extract_strided_slice %29 {offsets = [8, 0], sizes = [1, 128], strides = [1, 1]} : vector<16x128xf32> to vector<1x128xf32>
    %cst_36 = arith.constant 0.000000e+00 : f32
    %124 = vector.broadcast %cst_36 : f32 to vector<8x1xf32>
    %125 = arith.cmpf ogt, %122, %124 : vector<8x1xf32>
    %cst_37 = arith.constant -1.000000e+30 : f32
    %126 = vector.shape_cast %125 : vector<8x1xi1> to vector<8x1xi1>
    %127 = vector.broadcast %126 : vector<8x1xi1> to vector<8x128xi1>
    %128 = vector.shape_cast %123 : vector<1x128xf32> to vector<1x128xf32>
    %129 = vector.broadcast %128 : vector<1x128xf32> to vector<8x128xf32>
    %130 = vector.broadcast %cst_37 : f32 to vector<8x128xf32>
    %131 = arith.select %127, %129, %130 : vector<8x128xi1>, vector<8x128xf32>
    %132 = arith.maximumf %121, %131 : vector<8x128xf32>
    %133 = vector.extract_strided_slice %30 {offsets = [0, 9], sizes = [8, 1], strides = [1, 1]} : vector<8x16xf32> to vector<8x1xf32>
    %134 = vector.extract_strided_slice %29 {offsets = [9, 0], sizes = [1, 128], strides = [1, 1]} : vector<16x128xf32> to vector<1x128xf32>
    %cst_38 = arith.constant 0.000000e+00 : f32
    %135 = vector.broadcast %cst_38 : f32 to vector<8x1xf32>
    %136 = arith.cmpf ogt, %133, %135 : vector<8x1xf32>
    %cst_39 = arith.constant -1.000000e+30 : f32
    %137 = vector.shape_cast %136 : vector<8x1xi1> to vector<8x1xi1>
    %138 = vector.broadcast %137 : vector<8x1xi1> to vector<8x128xi1>
    %139 = vector.shape_cast %134 : vector<1x128xf32> to vector<1x128xf32>
    %140 = vector.broadcast %139 : vector<1x128xf32> to vector<8x128xf32>
    %141 = vector.broadcast %cst_39 : f32 to vector<8x128xf32>
    %142 = arith.select %138, %140, %141 : vector<8x128xi1>, vector<8x128xf32>
    %143 = arith.maximumf %132, %142 : vector<8x128xf32>
    %144 = vector.extract_strided_slice %30 {offsets = [0, 10], sizes = [8, 1], strides = [1, 1]} : vector<8x16xf32> to vector<8x1xf32>
    %145 = vector.extract_strided_slice %29 {offsets = [10, 0], sizes = [1, 128], strides = [1, 1]} : vector<16x128xf32> to vector<1x128xf32>
    %cst_40 = arith.constant 0.000000e+00 : f32
    %146 = vector.broadcast %cst_40 : f32 to vector<8x1xf32>
    %147 = arith.cmpf ogt, %144, %146 : vector<8x1xf32>
    %cst_41 = arith.constant -1.000000e+30 : f32
    %148 = vector.shape_cast %147 : vector<8x1xi1> to vector<8x1xi1>
    %149 = vector.broadcast %148 : vector<8x1xi1> to vector<8x128xi1>
    %150 = vector.shape_cast %145 : vector<1x128xf32> to vector<1x128xf32>
    %151 = vector.broadcast %150 : vector<1x128xf32> to vector<8x128xf32>
    %152 = vector.broadcast %cst_41 : f32 to vector<8x128xf32>
    %153 = arith.select %149, %151, %152 : vector<8x128xi1>, vector<8x128xf32>
    %154 = arith.maximumf %143, %153 : vector<8x128xf32>
    %155 = vector.extract_strided_slice %30 {offsets = [0, 11], sizes = [8, 1], strides = [1, 1]} : vector<8x16xf32> to vector<8x1xf32>
    %156 = vector.extract_strided_slice %29 {offsets = [11, 0], sizes = [1, 128], strides = [1, 1]} : vector<16x128xf32> to vector<1x128xf32>
    %cst_42 = arith.constant 0.000000e+00 : f32
    %157 = vector.broadcast %cst_42 : f32 to vector<8x1xf32>
    %158 = arith.cmpf ogt, %155, %157 : vector<8x1xf32>
    %cst_43 = arith.constant -1.000000e+30 : f32
    %159 = vector.shape_cast %158 : vector<8x1xi1> to vector<8x1xi1>
    %160 = vector.broadcast %159 : vector<8x1xi1> to vector<8x128xi1>
    %161 = vector.shape_cast %156 : vector<1x128xf32> to vector<1x128xf32>
    %162 = vector.broadcast %161 : vector<1x128xf32> to vector<8x128xf32>
    %163 = vector.broadcast %cst_43 : f32 to vector<8x128xf32>
    %164 = arith.select %160, %162, %163 : vector<8x128xi1>, vector<8x128xf32>
    %165 = arith.maximumf %154, %164 : vector<8x128xf32>
    %166 = vector.extract_strided_slice %30 {offsets = [0, 12], sizes = [8, 1], strides = [1, 1]} : vector<8x16xf32> to vector<8x1xf32>
    %167 = vector.extract_strided_slice %29 {offsets = [12, 0], sizes = [1, 128], strides = [1, 1]} : vector<16x128xf32> to vector<1x128xf32>
    %cst_44 = arith.constant 0.000000e+00 : f32
    %168 = vector.broadcast %cst_44 : f32 to vector<8x1xf32>
    %169 = arith.cmpf ogt, %166, %168 : vector<8x1xf32>
    %cst_45 = arith.constant -1.000000e+30 : f32
    %170 = vector.shape_cast %169 : vector<8x1xi1> to vector<8x1xi1>
    %171 = vector.broadcast %170 : vector<8x1xi1> to vector<8x128xi1>
    %172 = vector.shape_cast %167 : vector<1x128xf32> to vector<1x128xf32>
    %173 = vector.broadcast %172 : vector<1x128xf32> to vector<8x128xf32>
    %174 = vector.broadcast %cst_45 : f32 to vector<8x128xf32>
    %175 = arith.select %171, %173, %174 : vector<8x128xi1>, vector<8x128xf32>
    %176 = arith.maximumf %165, %175 : vector<8x128xf32>
    %177 = vector.extract_strided_slice %30 {offsets = [0, 13], sizes = [8, 1], strides = [1, 1]} : vector<8x16xf32> to vector<8x1xf32>
    %178 = vector.extract_strided_slice %29 {offsets = [13, 0], sizes = [1, 128], strides = [1, 1]} : vector<16x128xf32> to vector<1x128xf32>
    %cst_46 = arith.constant 0.000000e+00 : f32
    %179 = vector.broadcast %cst_46 : f32 to vector<8x1xf32>
    %180 = arith.cmpf ogt, %177, %179 : vector<8x1xf32>
    %cst_47 = arith.constant -1.000000e+30 : f32
    %181 = vector.shape_cast %180 : vector<8x1xi1> to vector<8x1xi1>
    %182 = vector.broadcast %181 : vector<8x1xi1> to vector<8x128xi1>
    %183 = vector.shape_cast %178 : vector<1x128xf32> to vector<1x128xf32>
    %184 = vector.broadcast %183 : vector<1x128xf32> to vector<8x128xf32>
    %185 = vector.broadcast %cst_47 : f32 to vector<8x128xf32>
    %186 = arith.select %182, %184, %185 : vector<8x128xi1>, vector<8x128xf32>
    %187 = arith.maximumf %176, %186 : vector<8x128xf32>
    %188 = vector.extract_strided_slice %30 {offsets = [0, 14], sizes = [8, 1], strides = [1, 1]} : vector<8x16xf32> to vector<8x1xf32>
    %189 = vector.extract_strided_slice %29 {offsets = [14, 0], sizes = [1, 128], strides = [1, 1]} : vector<16x128xf32> to vector<1x128xf32>
    %cst_48 = arith.constant 0.000000e+00 : f32
    %190 = vector.broadcast %cst_48 : f32 to vector<8x1xf32>
    %191 = arith.cmpf ogt, %188, %190 : vector<8x1xf32>
    %cst_49 = arith.constant -1.000000e+30 : f32
    %192 = vector.shape_cast %191 : vector<8x1xi1> to vector<8x1xi1>
    %193 = vector.broadcast %192 : vector<8x1xi1> to vector<8x128xi1>
    %194 = vector.shape_cast %189 : vector<1x128xf32> to vector<1x128xf32>
    %195 = vector.broadcast %194 : vector<1x128xf32> to vector<8x128xf32>
    %196 = vector.broadcast %cst_49 : f32 to vector<8x128xf32>
    %197 = arith.select %193, %195, %196 : vector<8x128xi1>, vector<8x128xf32>
    %198 = arith.maximumf %187, %197 : vector<8x128xf32>
    %199 = vector.extract_strided_slice %30 {offsets = [0, 15], sizes = [8, 1], strides = [1, 1]} : vector<8x16xf32> to vector<8x1xf32>
    %200 = vector.extract_strided_slice %29 {offsets = [15, 0], sizes = [1, 128], strides = [1, 1]} : vector<16x128xf32> to vector<1x128xf32>
    %cst_50 = arith.constant 0.000000e+00 : f32
    %201 = vector.broadcast %cst_50 : f32 to vector<8x1xf32>
    %202 = arith.cmpf ogt, %199, %201 : vector<8x1xf32>
    %cst_51 = arith.constant -1.000000e+30 : f32
    %203 = vector.shape_cast %202 : vector<8x1xi1> to vector<8x1xi1>
    %204 = vector.broadcast %203 : vector<8x1xi1> to vector<8x128xi1>
    %205 = vector.shape_cast %200 : vector<1x128xf32> to vector<1x128xf32>
    %206 = vector.broadcast %205 : vector<1x128xf32> to vector<8x128xf32>
    %207 = vector.broadcast %cst_51 : f32 to vector<8x128xf32>
    %208 = arith.select %204, %206, %207 : vector<8x128xi1>, vector<8x128xf32>
    %209 = arith.maximumf %198, %208 : vector<8x128xf32>
    %cst_52 = arith.constant 0.000000e+00 : f32
    %210 = vector.broadcast %cst_52 : f32 to vector<8x1xf32>
    %211 = arith.cmpf ogt, %32, %210 : vector<8x1xf32>
    %cst_53 = arith.constant 0.000000e+00 : f32
    %212 = vector.shape_cast %211 : vector<8x1xi1> to vector<8x1xi1>
    %213 = vector.broadcast %212 : vector<8x1xi1> to vector<8x128xi1>
    %214 = vector.broadcast %cst_53 : f32 to vector<8x128xf32>
    %215 = arith.select %213, %209, %214 : vector<8x128xi1>, vector<8x128xf32>
    %216 = arith.truncf %215 : vector<8x128xf32> to vector<8x128xbf16>
    %c512 = arith.constant 512 : index
    %c0_54 = arith.constant 0 : index
    %217 = vector.load %arg3[%c512, %c0_54] : memref<768x128xbf16, #tpu.memory_space<vmem>>, vector<128x128xbf16>
    %cst_55 = arith.constant dense<0.000000e+00> : vector<8x128xf32>
    %218 = tpu.matmul %216, %217, %cst_55 {dimension_numbers = #tpu.dot_dimension_numbers<[1], [0], [0], [1], [0, 0, 1, 1], [], []>} : vector<8x128xbf16>, vector<128x128xbf16>, vector<8x128xf32> -> vector<8x128xf32>
    %c2 = arith.constant 2 : index
    %c0_56 = arith.constant 0 : index
    %219 = vector.load %arg4[%c2, %c0_56] : memref<4x128xf32, #tpu.memory_space<vmem>>, vector<1x128xf32>
    %220 = vector.broadcast %219 : vector<1x128xf32> to vector<8x128xf32>
    %221 = arith.addf %218, %220 : vector<8x128xf32>
    %cst_57 = arith.constant 0.000000e+00 : f32
    %222 = vector.broadcast %cst_57 : f32 to vector<8x128xf32>
    %223 = arith.cmpf ogt, %221, %222 : vector<8x128xf32>
    %cst_58 = arith.constant 0.00999999977 : f32
    %224 = vector.broadcast %cst_58 : f32 to vector<8x128xf32>
    %225 = arith.mulf %224, %221 : vector<8x128xf32>
    %226 = arith.select %223, %221, %225 : vector<8x128xi1>, vector<8x128xf32>
    %227 = arith.truncf %226 : vector<8x128xf32> to vector<8x128xbf16>
    %c640 = arith.constant 640 : index
    %c0_59 = arith.constant 0 : index
    %228 = vector.load %arg3[%c640, %c0_59] : memref<768x128xbf16, #tpu.memory_space<vmem>>, vector<128x128xbf16>
    %cst_60 = arith.constant dense<0.000000e+00> : vector<8x128xf32>
    %229 = tpu.matmul %227, %228, %cst_60 {dimension_numbers = #tpu.dot_dimension_numbers<[1], [0], [0], [1], [0, 0, 1, 1], [], []>} : vector<8x128xbf16>, vector<128x128xbf16>, vector<8x128xf32> -> vector<8x128xf32>
    %c3 = arith.constant 3 : index
    %c0_61 = arith.constant 0 : index
    %230 = vector.load %arg4[%c3, %c0_61] : memref<4x128xf32, #tpu.memory_space<vmem>>, vector<1x128xf32>
    %231 = vector.broadcast %230 : vector<1x128xf32> to vector<8x128xf32>
    %232 = arith.addf %229, %231 : vector<8x128xf32>
    %233 = math.tanh %232 : vector<8x128xf32>
    %c0_62 = arith.constant 0 : index
    %c0_63 = arith.constant 0 : index
    %234 = vector.load %arg5[%c0_62, %c0_63] : memref<8x128xf32, #tpu.memory_space<vmem>>, vector<8x128xf32>
    tpu.vector_store %arg5[%c0_62, %c0_63], %233 {strides = array<i32>} : memref<8x128xf32, #tpu.memory_space<vmem>>, vector<8x128xf32>,
    return
  }
}

</mosaic_0001>

<llo_original>
// kernel: vagnn_forward.1
$region0: #{vagnn_forward.1}
  #allocation0 [shape = 'u32[]', space=smem, size = 0x4, offset = 0x4, fixed_abs, tag = 'smem constant byte address 0x4 - core index']
  #allocation1 [shape = 'u32[144,128]{1,0:T(1,128)}', space=vmem, size = 0x12000, scoped, tag = 'internal scratch']
  %s0 = inlined_call_operand.vmem [shape: f32[16,16], index: 0, kind: input, shape index: {}]
  %s1 = inlined_call_operand.vmem [shape: f32[8,16], index: 1, kind: input, shape index: {}]
  %s2 = inlined_call_operand.vmem [shape: bf16[16,128], index: 2, kind: input, shape index: {}]
  %s3 = inlined_call_operand.hbm [shape: bf16[768,128], index: 3, kind: input, shape index: {}]
  %s4 = inlined_call_operand.vmem [shape: f32[4,128], index: 4, kind: input, shape index: {}]
  %s5 = inlined_call_operand.hbm [shape: f32[8,128], index: 5, kind: output, shape index: {}]
  %s6 = sld [smem:[#allocation0]]
  $region34: #{vagnn_forward.1} parent=0
    _
  %s8 = ssub.s32 1, %s6
  %s9 = scalar_select 0, %s8, %s6
  $region1: #{vagnn_forward.1} parent=0
    #allocation2 [shape = 'u8[196608]{0}', space=vmem, size = 0x30000, scoped, tag = 'input window, operand 3, single buffered']
    #allocation3 [shape = 's32[1]{0}', space=sflag, size = 0x4, scoped, tag = 'scoped memory for vagnn_forward.1']
    #allocation4 [shape = 's32[1]{0}', space=sflag, size = 0x4, scoped, tag = 'scoped memory for vagnn_forward.1']
    #allocation5 [shape = 'u8[4096]{0}', space=vmem, size = 0x1000, scoped, tag = 'output window, operand 0, single buffered']
    %10 = vsyncpa [#allocation3], 0
    %11 = vsyncpa [#allocation4], 0
    // Predicated region
    $region2: #{vagnn_forward.1} parent=1 // pred_check
      _
    $region3: #{vagnn_forward.1} parent=1 // pred_check_branch
      %13 = sbr.rel (0) target = $region5
    $region4: #{vagnn_forward.1} parent=1 // pred_region
      _
    $region5: #{vagnn_forward.1} parent=1 // pred_fallthru
      _
    // Predicated region
    $region6: #{vagnn_forward.1} parent=1 // pred_check
      _
    $region7: #{vagnn_forward.1} parent=1 // pred_check_branch
      %15 = sbr.rel (0) target = $region9
    $region8: #{vagnn_forward.1} parent=1 // pred_region
      _
    $region9: #{vagnn_forward.1} parent=1 // pred_fallthru
      _
    // Predicated region
    $region10: #{vagnn_forward.1} parent=1 // pred_check
      _
    $region11: #{vagnn_forward.1} parent=1 // pred_check_branch
      %17 = sbr.rel (0) target = $region13
    $region12: #{vagnn_forward.1} parent=1 // pred_region
      _
    $region13: #{vagnn_forward.1} parent=1 // pred_fallthru
      _
    // Predicated region
    $region14: #{vagnn_forward.1} parent=1 // pred_check
      _
    $region15: #{vagnn_forward.1} parent=1 // pred_check_branch
      %19 = sbr.rel (0) target = $region17
    $region16: #{vagnn_forward.1} parent=1 // pred_region
      %s21 = ssub.s32 6144, 6144
      %22 = vsyncadd [#allocation3], %s21
      %s23 = sshll.u32 [#allocation2], 4
      %s24 = int_to_ptr.vmem [resolvable:$true] %s23
      %29 = dma.hbm_to_vmem [thread:$0]  %s3, 6144, %s24, [#allocation3], 64, 64, 4
    $region17: #{vagnn_forward.1} parent=1 // pred_fallthru
      _
    // Predicated region
    $region18: #{vagnn_forward.1} parent=1 // pred_check
      _
    $region19: #{vagnn_forward.1} parent=1 // pred_check_branch
      %31 = sbr.rel (0) target = $region21
    $region20: #{vagnn_forward.1} parent=1 // pred_region
      _
    $region21: #{vagnn_forward.1} parent=1 // pred_fallthru
      _
    // Predicated region
    $region22: #{vagnn_forward.1} parent=1 // pred_check
      _
    $region23: #{vagnn_forward.1} parent=1 // pred_check_branch
      %33 = sbr.rel (0) target = $region25
    $region24: #{vagnn_forward.1} parent=1 // pred_region
      %34 = dma.done [#allocation3], 6144
    $region25: #{vagnn_forward.1} parent=1 // pred_fallthru
      _
    %v36 = vld [vmem:[%s0] sm:$0xff]
    %v37 = vld [vmem:[%s0 + $0x8] sm:$0xff]
    %v38 = vld [vmem:[%s2] sm:$0xf]
    %v39 = vld [vmem:[%s2 + $0x4] sm:$0xf]
    %v40 = vunpack.c.l.bf16 %v38
    %v41 = vunpack.c.l.bf16 %v39
    %vm42 = vcmask 130048
    %v44 = vsel %vm42, %v36, 0
    %v47 = vsel %vm42, %v37, 0
    %49 = vmatprep.subr.mxu0 0.0
    %50 = vmatpush1.msra.mxu0 %v40
    %51 = vmatprep.subr.mxu0 0.0
    %52 = vmatpush1.msra.mxu0 %v41
    %53 = vmatprep.subr.mxu0 0.0
    %54 = vmatpush1.msra.mxu0 0.0
    %55 = vmatprep.subr.mxu0 0.0
    %56 = vmatpush1.msra.mxu0 0.0
    %57 = vmatprep.subr.mxu0 0.0
    %58 = vmatpush1.msra.mxu0 0.0
    %59 = vmatprep.subr.mxu0 0.0
    %60 = vmatpush1.msra.mxu0 0.0
    %61 = vmatprep.subr.mxu0 0.0
    %62 = vmatpush1.msra.mxu0 0.0
    %63 = vmatprep.subr.mxu0 0.0
    %64 = vmatpush1.msra.mxu0 0.0
    %65 = vmatprep.subr.mxu0 0.0
    %66 = vmatpush1.msra.mxu0 0.0
    %67 = vmatprep.subr.mxu0 0.0
    %68 = vmatpush1.msra.mxu0 0.0
    %69 = vmatprep.subr.mxu0 0.0
    %70 = vmatpush1.msra.mxu0 0.0
    %71 = vmatprep.subr.mxu0 0.0
    %72 = vmatpush1.msra.mxu0 0.0
    %73 = vmatprep.subr.mxu0 0.0
    %74 = vmatpush1.msra.mxu0 0.0
    %75 = vmatprep.subr.mxu0 0.0
    %76 = vmatpush1.msra.mxu0 0.0
    %77 = vmatprep.subr.mxu0 0.0
    %78 = vmatpush1.msra.mxu0 0.0
    %79 = vmatprep.subr.mxu0 0.0
    %80 = vmatpush1.msra.mxu0 0.0
    %81 = vmatprep.subr.mxu0 0.0
    %82 = vmatpush1.msra.mxu0 0.0
    %83 = vmatprep.subr.mxu0 0.0
    %84 = vmatpush1.msra.mxu0 0.0
    %85 = vmatprep.subr.mxu0 0.0
    %86 = vmatpush1.msra.mxu0 0.0
    %87 = vmatprep.subr.mxu0 0.0
    %88 = vmatpush1.msra.mxu0 0.0
    %89 = vmatprep.subr.mxu0 0.0
    %90 = vmatpush1.msra.mxu0 0.0
    %91 = vmatprep.subr.mxu0 0.0
    %92 = vmatpush1.msra.mxu0 0.0
    %93 = vmatprep.subr.mxu0 0.0
    %94 = vmatpush1.msra.mxu0 0.0
    %95 = vmatprep.subr.mxu0 0.0
    %96 = vmatpush1.msra.mxu0 0.0
    %97 = vmatprep.subr.mxu0 0.0
    %98 = vmatpush1.msra.mxu0 0.0
    %99 = vmatprep.subr.mxu0 0.0
    %100 = vmatpush1.msra.mxu0 0.0
    %101 = vmatprep.subr.mxu0 0.0
    %102 = vmatpush1.msra.mxu0 0.0
    %103 = vmatprep.subr.mxu0 0.0
    %104 = vmatpush1.msra.mxu0 0.0
    %105 = vmatprep.subr.mxu0 0.0
    %106 = vmatpush1.msra.mxu0 0.0
    %107 = vmatprep.subr.mxu0 0.0
    %108 = vmatpush1.msra.mxu0 0.0
    %109 = vmatprep.subr.mxu0 0.0
    %110 = vmatpush1.msra.mxu0 0.0
    %111 = vmatprep.subr.mxu0 0.0
    %112 = vmatpush1.msra.mxu0 0.0
    %113 = vmatprep.mubr.f32.mxu0 0.0
    %114 = vmatmul.mubr.f32.gmra.mrb[0].mxu0 %v44
    %v115 = vpop.f32.mrb[0].mxu0
    %v116 = vadd.f32 0.0, %v115
    %v117 = vpop.f32.mrb[0].mxu0
    %118 = vmatprep.mubr.f32.mxu0 0.0
    %119 = vmatmul.mubr.f32.gmra.mrb[0].mxu0 %v47
    %v120 = vpop.f32.mrb[0].mxu0
    %v121 = vadd.f32 0.0, %v120
    %v122 = vpop.f32.mrb[0].mxu0
    %123 = vdwg.mxu0
    %v124 = vpack.c.bf16 %v121, %v116
    %v127 = vunpack.c.l.b16 %v38
    %v128 = vunpack.c.l.b16 %v39
    %v129 = vpack.c.b16 %v128, %v127
    %v131 = vld [vmem:[#allocation2] sm:$0xf]
    %v132 = vld [vmem:[#allocation2 + $0x4] sm:$0xf]
    %v133 = vld [vmem:[#allocation2 + $0x8] sm:$0xf]
    %v134 = vld [vmem:[#allocation2 + $0xc] sm:$0xf]
    %v135 = vld [vmem:[#allocation2 + $0x10] sm:$0xf]
    %v136 = vld [vmem:[#allocation2 + $0x14] sm:$0xf]
    %v137 = vld [vmem:[#allocation2 + $0x18] sm:$0xf]
    %v138 = vld [vmem:[#allocation2 + $0x1c] sm:$0xf]
    %v139 = vld [vmem:[#allocation2 + $0x20] sm:$0xf]
    %v140 = vld [vmem:[#allocation2 + $0x24] sm:$0xf]
    %v141 = vld [vmem:[#allocation2 + $0x28] sm:$0xf]
    %v142 = vld [vmem:[#allocation2 + $0x2c] sm:$0xf]
    %v143 = vld [vmem:[#allocation2 + $0x30] sm:$0xf]
    %v144 = vld [vmem:[#allocation2 + $0x34] sm:$0xf]
    %v145 = vld [vmem:[#allocation2 + $0x38] sm:$0xf]
    %v146 = vld [vmem:[#allocation2 + $0x3c] sm:$0xf]
    %v147 = vld [vmem:[#allocation2 + $0x40] sm:$0xf]
    %v148 = vld [vmem:[#allocation2 + $0x44] sm:$0xf]
    %v149 = vld [vmem:[#allocation2 + $0x48] sm:$0xf]
    %v150 = vld [vmem:[#allocation2 + $0x4c] sm:$0xf]
    %v151 = vld [vmem:[#allocation2 + $0x50] sm:$0xf]
    %v152 = vld [vmem:[#allocation2 + $0x54] sm:$0xf]
    %v153 = vld [vmem:[#allocation2 + $0x58] sm:$0xf]
    %v154 = vld [vmem:[#allocation2 + $0x5c] sm:$0xf]
    %v155 = vld [vmem:[#allocation2 + $0x60] sm:$0xf]
    %v156 = vld [vmem:[#allocation2 + $0x64] sm:$0xf]
    %v157 = vld [vmem:[#allocation2 + $0x68] sm:$0xf]
    %v158 = vld [vmem:[#allocation2 + $0x6c] sm:$0xf]
    %v159 = vld [vmem:[#allocation2 + $0x70] sm:$0xf]
    %v160 = vld [vmem:[#allocation2 + $0x74] sm:$0xf]
    %v161 = vld [vmem:[#allocation2 + $0x78] sm:$0xf]
    %v162 = vld [vmem:[#allocation2 + $0x7c] sm:$0xf]
    %v163 = vld [vmem:[%s4] sm:$0x1]
    %v164 = vlaneseq
    %v165 = vshrl.u32 %v164, 7
    %v166 = vsub.s32 0, %v165
    %v167 = vrot.slane %v163, %v166
    %v200 = vunpack.c.l.b16 %v131
    %v201 = vunpack.c.l.b16 %v132
    %v202 = vunpack.c.l.b16 %v133
    %v203 = vunpack.c.l.b16 %v134
    %v204 = vunpack.c.l.b16 %v135
    %v205 = vunpack.c.l.b16 %v136
    %v206 = vunpack.c.l.b16 %v137
    %v207 = vunpack.c.l.b16 %v138
    %v208 = vunpack.c.l.b16 %v139
    %v209 = vunpack.c.l.b16 %v140
    %v210 = vunpack.c.l.b16 %v141
    %v211 = vunpack.c.l.b16 %v142
    %v212 = vunpack.c.l.b16 %v143
    %v213 = vunpack.c.l.b16 %v144
    %v214 = vunpack.c.l.b16 %v145
    %v215 = vunpack.c.l.b16 %v146
    %v216 = vunpack.c.l.b16 %v147
    %v217 = vunpack.c.l.b16 %v148
    %v218 = vunpack.c.l.b16 %v149
    %v219 = vunpack.c.l.b16 %v150
    %v220 = vunpack.c.l.b16 %v151
    %v221 = vunpack.c.l.b16 %v152
    %v222 = vunpack.c.l.b16 %v153
    %v223 = vunpack.c.l.b16 %v154
    %v224 = vunpack.c.l.b16 %v155
    %v225 = vunpack.c.l.b16 %v156
    %v226 = vunpack.c.l.b16 %v157
    %v227 = vunpack.c.l.b16 %v158
    %v228 = vunpack.c.l.b16 %v159
    %v229 = vunpack.c.l.b16 %v160
    %v230 = vunpack.c.l.b16 %v161
    %v231 = vunpack.c.l.b16 %v162
    %v232 = vpack.c.b16 %v201, %v200
    %v233 = vpack.c.b16 %v203, %v202
    %v234 = vpack.c.b16 %v205, %v204
    %v235 = vpack.c.b16 %v207, %v206
    %v236 = vpack.c.b16 %v209, %v208
    %v237 = vpack.c.b16 %v211, %v210
    %v238 = vpack.c.b16 %v213, %v212
    %v239 = vpack.c.b16 %v215, %v214
    %v240 = vpack.c.b16 %v217, %v216
    %v241 = vpack.c.b16 %v219, %v218
    %v242 = vpack.c.b16 %v221, %v220
    %v243 = vpack.c.b16 %v223, %v222
    %v244 = vpack.c.b16 %v225, %v224
    %v245 = vpack.c.b16 %v227, %v226
    %v246 = vpack.c.b16 %v229, %v228
    %v247 = vpack.c.b16 %v231, %v230
    %264 = vmatprep.subr.bf16.mxu0 0
    %265 = vmatpush1.bf16.msra.mxu0 %v232
    %266 = vmatprep.subr.bf16.mxu0 0
    %267 = vmatpush1.bf16.msra.mxu0 %v233
    %268 = vmatprep.subr.bf16.mxu0 0
    %269 = vmatpush1.bf16.msra.mxu0 %v234
    %270 = vmatprep.subr.bf16.mxu0 0
    %271 = vmatpush1.bf16.msra.mxu0 %v235
    %272 = vmatprep.subr.bf16.mxu0 0
    %273 = vmatpush1.bf16.msra.mxu0 %v236
    %274 = vmatprep.subr.bf16.mxu0 0
    %275 = vmatpush1.bf16.msra.mxu0 %v237
    %276 = vmatprep.subr.bf16.mxu0 0
    %277 = vmatpush1.bf16.msra.mxu0 %v238
    %278 = vmatprep.subr.bf16.mxu0 0
    %279 = vmatpush1.bf16.msra.mxu0 %v239
    %280 = vmatprep.subr.bf16.mxu0 0
    %281 = vmatpush1.bf16.msra.mxu0 %v240
    %282 = vmatprep.subr.bf16.mxu0 0
    %283 = vmatpush1.bf16.msra.mxu0 %v241
    %284 = vmatprep.subr.bf16.mxu0 0
    %285 = vmatpush1.bf16.msra.mxu0 %v242
    %286 = vmatprep.subr.bf16.mxu0 0
    %287 = vmatpush1.bf16.msra.mxu0 %v243
    %288 = vmatprep.subr.bf16.mxu0 0
    %289 = vmatpush1.bf16.msra.mxu0 %v244
    %290 = vmatprep.subr.bf16.mxu0 0
    %291 = vmatpush1.bf16.msra.mxu0 %v245
    %292 = vmatprep.subr.bf16.mxu0 0
    %293 = vmatpush1.bf16.msra.mxu0 %v246
    %294 = vmatprep.subr.bf16.mxu0 0
    %295 = vmatpush1.bf16.msra.mxu0 %v247
    %296 = vmatprep.mubr.bf16.mxu0 %v124
    %297 = vmatmul.mubr.bf16.gmra.mrb[0].mxu0 %v129
    %v298 = vpop.f32.mrb[0].mxu0
    %v299 = vadd.f32 %v167, %v298
    %v300 = vpop.f32.mrb[0].mxu0
    %v301 = vpop.f32.mrb[0].mxu0
    %v302 = vadd.f32 %v167, %v301
    %v303 = vpop.f32.mrb[0].mxu0
    %304 = vdwg.mxu0
    %vm305 = vcmp.gt.f32.partialorder %v299, 0.0
    %vm306 = vcmp.gt.f32.partialorder %v302, 0.0
    %v307 = vmul.f32 %v299, 0.01
    %v308 = vmul.f32 %v302, 0.01
    %v309 = vsel %vm305, %v299, %v307
    %v310 = vsel %vm306, %v302, %v308
    %v311 = vpack.c.bf16 %v310, %v309
    %312 = vmatprep.subr.mxu0 0.0
    %313 = vmatpush1.msra.mxu0 %v309
    %314 = vmatprep.subr.mxu0 0.0
    %315 = vmatpush1.msra.mxu0 %v310
    %316 = vmatprep.subr.mxu0 0.0
    %317 = vmatpush1.msra.mxu0 0.0
    %318 = vmatprep.subr.mxu0 0.0
    %319 = vmatpush1.msra.mxu0 0.0
    %320 = vmatprep.subr.mxu0 0.0
    %321 = vmatpush1.msra.mxu0 0.0
    %322 = vmatprep.subr.mxu0 0.0
    %323 = vmatpush1.msra.mxu0 0.0
    %324 = vmatprep.subr.mxu0 0.0
    %325 = vmatpush1.msra.mxu0 0.0
    %326 = vmatprep.subr.mxu0 0.0
    %327 = vmatpush1.msra.mxu0 0.0
    %328 = vmatprep.subr.mxu0 0.0
    %329 = vmatpush1.msra.mxu0 0.0
    %330 = vmatprep.subr.mxu0 0.0
    %331 = vmatpush1.msra.mxu0 0.0
    %332 = vmatprep.subr.mxu0 0.0
    %333 = vmatpush1.msra.mxu0 0.0
    %334 = vmatprep.subr.mxu0 0.0
    %335 = vmatpush1.msra.mxu0 0.0
    %336 = vmatprep.subr.mxu0 0.0
    %337 = vmatpush1.msra.mxu0 0.0
    %338 = vmatprep.subr.mxu0 0.0
    %339 = vmatpush1.msra.mxu0 0.0
    %340 = vmatprep.subr.mxu0 0.0
    %341 = vmatpush1.msra.mxu0 0.0
    %342 = vmatprep.subr.mxu0 0.0
    %343 = vmatpush1.msra.mxu0 0.0
    %344 = vmatprep.subr.mxu0 0.0
    %345 = vmatpush1.msra.mxu0 0.0
    %346 = vmatprep.subr.mxu0 0.0
    %347 = vmatpush1.msra.mxu0 0.0
    %348 = vmatprep.subr.mxu0 0.0
    %349 = vmatpush1.msra.mxu0 0.0
    %350 = vmatprep.subr.mxu0 0.0
    %351 = vmatpush1.msra.mxu0 0.0
    %352 = vmatprep.subr.mxu0 0.0
    %353 = vmatpush1.msra.mxu0 0.0
    %354 = vmatprep.subr.mxu0 0.0
    %355 = vmatpush1.msra.mxu0 0.0
    %356 = vmatprep.subr.mxu0 0.0
    %357 = vmatpush1.msra.mxu0 0.0
    %358 = vmatprep.subr.mxu0 0.0
    %359 = vmatpush1.msra.mxu0 0.0
    %360 = vmatprep.subr.mxu0 0.0
    %361 = vmatpush1.msra.mxu0 0.0
    %362 = vmatprep.subr.mxu0 0.0
    %363 = vmatpush1.msra.mxu0 0.0
    %364 = vmatprep.subr.mxu0 0.0
    %365 = vmatpush1.msra.mxu0 0.0
    %366 = vmatprep.subr.mxu0 0.0
    %367 = vmatpush1.msra.mxu0 0.0
    %368 = vmatprep.subr.mxu0 0.0
    %369 = vmatpush1.msra.mxu0 0.0
    %370 = vmatprep.subr.mxu0 0.0
    %371 = vmatpush1.msra.mxu0 0.0
    %372 = vmatprep.subr.mxu0 0.0
    %373 = vmatpush1.msra.mxu0 0.0
    %374 = vmatprep.subr.mxu0 0.0
    %375 = vmatpush1.msra.mxu0 0.0
    %376 = vmatprep.mubr.f32.mxu0 0.0
    %377 = vmatmul.mubr.f32.gmra.mrb[0].mxu0 %v44
    %v378 = vpop.f32.mrb[0].mxu0
    %v379 = vadd.f32 0.0, %v378
    %v380 = vpop.f32.mrb[0].mxu0
    %381 = vmatprep.mubr.f32.mxu0 0.0
    %382 = vmatmul.mubr.f32.gmra.mrb[0].mxu0 %v47
    %v383 = vpop.f32.mrb[0].mxu0
    %v384 = vadd.f32 0.0, %v383
    %v385 = vpop.f32.mrb[0].mxu0
    %386 = vdwg.mxu0
    %v387 = vpack.c.bf16 %v384, %v379
    %v388 = vld [vmem:[#allocation2 + $0x80] sm:$0xf]
    %v389 = vld [vmem:[#allocation2 + $0x84] sm:$0xf]
    %v390 = vld [vmem:[#allocation2 + $0x88] sm:$0xf]
    %v391 = vld [vmem:[#allocation2 + $0x8c] sm:$0xf]
    %v392 = vld [vmem:[#allocation2 + $0x90] sm:$0xf]
    %v393 = vld [vmem:[#allocation2 + $0x94] sm:$0xf]
    %v394 = vld [vmem:[#allocation2 + $0x98] sm:$0xf]
    %v395 = vld [vmem:[#allocation2 + $0x9c] sm:$0xf]
    %v396 = vld [vmem:[#allocation2 + $0xa0] sm:$0xf]
    %v397 = vld [vmem:[#allocation2 + $0xa4] sm:$0xf]
    %v398 = vld [vmem:[#allocation2 + $0xa8] sm:$0xf]
    %v399 = vld [vmem:[#allocation2 + $0xac] sm:$0xf]
    %v400 = vld [vmem:[#allocation2 + $0xb0] sm:$0xf]
    %v401 = vld [vmem:[#allocation2 + $0xb4] sm:$0xf]
    %v402 = vld [vmem:[#allocation2 + $0xb8] sm:$0xf]
    %v403 = vld [vmem:[#allocation2 + $0xbc] sm:$0xf]
    %v404 = vld [vmem:[#allocation2 + $0xc0] sm:$0xf]
    %v405 = vld [vmem:[#allocation2 + $0xc4] sm:$0xf]
    %v406 = vld [vmem:[#allocation2 + $0xc8] sm:$0xf]
    %v407 = vld [vmem:[#allocation2 + $0xcc] sm:$0xf]
    %v408 = vld [vmem:[#allocation2 + $0xd0] sm:$0xf]
    %v409 = vld [vmem:[#allocation2 + $0xd4] sm:$0xf]
    %v410 = vld [vmem:[#allocation2 + $0xd8] sm:$0xf]
    %v411 = vld [vmem:[#allocation2 + $0xdc] sm:$0xf]
    %v412 = vld [vmem:[#allocation2 + $0xe0] sm:$0xf]
    %v413 = vld [vmem:[#allocation2 + $0xe4] sm:$0xf]
    %v414 = vld [vmem:[#allocation2 + $0xe8] sm:$0xf]
    %v415 = vld [vmem:[#allocation2 + $0xec] sm:$0xf]
    %v416 = vld [vmem:[#allocation2 + $0xf0] sm:$0xf]
    %v417 = vld [vmem:[#allocation2 + $0xf4] sm:$0xf]
    %v418 = vld [vmem:[#allocation2 + $0xf8] sm:$0xf]
    %v419 = vld [vmem:[#allocation2 + $0xfc] sm:$0xf]
    %v420 = vld [vmem:[%s4 + $0x1] sm:$0x1]
    %v421 = vlaneseq
    %v422 = vshrl.u32 %v421, 7
    %v423 = vsub.s32 0, %v422
    %v424 = vrot.slane %v420, %v423
    %v457 = vunpack.c.l.b16 %v388
    %v458 = vunpack.c.l.b16 %v389
    %v459 = vunpack.c.l.b16 %v390
    %v460 = vunpack.c.l.b16 %v391
    %v461 = vunpack.c.l.b16 %v392
    %v462 = vunpack.c.l.b16 %v393
    %v463 = vunpack.c.l.b16 %v394
    %v464 = vunpack.c.l.b16 %v395
    %v465 = vunpack.c.l.b16 %v396
    %v466 = vunpack.c.l.b16 %v397
    %v467 = vunpack.c.l.b16 %v398
    %v468 = vunpack.c.l.b16 %v399
    %v469 = vunpack.c.l.b16 %v400
    %v470 = vunpack.c.l.b16 %v401
    %v471 = vunpack.c.l.b16 %v402
    %v472 = vunpack.c.l.b16 %v403
    %v473 = vunpack.c.l.b16 %v404
    %v474 = vunpack.c.l.b16 %v405
    %v475 = vunpack.c.l.b16 %v406
    %v476 = vunpack.c.l.b16 %v407
    %v477 = vunpack.c.l.b16 %v408
    %v478 = vunpack.c.l.b16 %v409
    %v479 = vunpack.c.l.b16 %v410
    %v480 = vunpack.c.l.b16 %v411
    %v481 = vunpack.c.l.b16 %v412
    %v482 = vunpack.c.l.b16 %v413
    %v483 = vunpack.c.l.b16 %v414
    %v484 = vunpack.c.l.b16 %v415
    %v485 = vunpack.c.l.b16 %v416
    %v486 = vunpack.c.l.b16 %v417
    %v487 = vunpack.c.l.b16 %v418
    %v488 = vunpack.c.l.b16 %v419
    %v489 = vpack.c.b16 %v458, %v457
    %v490 = vpack.c.b16 %v460, %v459
    %v491 = vpack.c.b16 %v462, %v461
    %v492 = vpack.c.b16 %v464, %v463
    %v493 = vpack.c.b16 %v466, %v465
    %v494 = vpack.c.b16 %v468, %v467
    %v495 = vpack.c.b16 %v470, %v469
    %v496 = vpack.c.b16 %v472, %v471
    %v497 = vpack.c.b16 %v474, %v473
    %v498 = vpack.c.b16 %v476, %v475
    %v499 = vpack.c.b16 %v478, %v477
    %v500 = vpack.c.b16 %v480, %v479
    %v501 = vpack.c.b16 %v482, %v481
    %v502 = vpack.c.b16 %v484, %v483
    %v503 = vpack.c.b16 %v486, %v485
    %v504 = vpack.c.b16 %v488, %v487
    %521 = vmatprep.subr.bf16.mxu0 0
    %522 = vmatpush1.bf16.msra.mxu0 %v489
    %523 = vmatprep.subr.bf16.mxu0 0
    %524 = vmatpush1.bf16.msra.mxu0 %v490
    %525 = vmatprep.subr.bf16.mxu0 0
    %526 = vmatpush1.bf16.msra.mxu0 %v491
    %527 = vmatprep.subr.bf16.mxu0 0
    %528 = vmatpush1.bf16.msra.mxu0 %v492
    %529 = vmatprep.subr.bf16.mxu0 0
    %530 = vmatpush1.bf16.msra.mxu0 %v493
    %531 = vmatprep.subr.bf16.mxu0 0
    %532 = vmatpush1.bf16.msra.mxu0 %v494
    %533 = vmatprep.subr.bf16.mxu0 0
    %534 = vmatpush1.bf16.msra.mxu0 %v495
    %535 = vmatprep.subr.bf16.mxu0 0
    %536 = vmatpush1.bf16.msra.mxu0 %v496
    %537 = vmatprep.subr.bf16.mxu0 0
    %538 = vmatpush1.bf16.msra.mxu0 %v497
    %539 = vmatprep.subr.bf16.mxu0 0
    %540 = vmatpush1.bf16.msra.mxu0 %v498
    %541 = vmatprep.subr.bf16.mxu0 0
    %542 = vmatpush1.bf16.msra.mxu0 %v499
    %543 = vmatprep.subr.bf16.mxu0 0
    %544 = vmatpush1.bf16.msra.mxu0 %v500
    %545 = vmatprep.subr.bf16.mxu0 0
    %546 = vmatpush1.bf16.msra.mxu0 %v501
    %547 = vmatprep.subr.bf16.mxu0 0
    %548 = vmatpush1.bf16.msra.mxu0 %v502
    %549 = vmatprep.subr.bf16.mxu0 0
    %550 = vmatpush1.bf16.msra.mxu0 %v503
    %551 = vmatprep.subr.bf16.mxu0 0
    %552 = vmatpush1.bf16.msra.mxu0 %v504
    %553 = vmatprep.mubr.bf16.mxu0 %v387
    %554 = vmatmul.mubr.bf16.gmra.mrb[0].mxu0 %v311
    %v555 = vpop.f32.mrb[0].mxu0
    %v556 = vadd.f32 %v424, %v555
    %v557 = vpop.f32.mrb[0].mxu0
    %v558 = vpop.f32.mrb[0].mxu0
    %v559 = vadd.f32 %v424, %v558
    %v560 = vpop.f32.mrb[0].mxu0
    %561 = vdwg.mxu0
    %vm562 = vcmp.gt.f32.partialorder %v556, 0.0
    %vm563 = vcmp.gt.f32.partialorder %v559, 0.0
    %v564 = vmul.f32 %v556, 0.01
    %v565 = vmul.f32 %v559, 0.01
    %v566 = vsel %vm562, %v556, %v564
    %v567 = vsel %vm563, %v559, %v565
    %v568 = vld [vmem:[%s1] sm:$0xff]
    %v569 = vsel %vm42, %v568, 0.0
    %570 = vadd.xlane.f32.xlu0 %v569
    %v571 = vpop.xlane.xlu0 %570
    %vm572 = vcmp.gt.f32.partialorder %v568, 0.0
    %v573 = vsel %vm572, 1, 0
    %574 = vset.pattern.permute.xlu0 0
    %575 = vperm.xlu0 %574, %v573
    %v576 = vpop.permute.xlu0 %575
    %vm577 = vcmp.eq.s32.totalorder %v576, 1
    %v578 = vlaneseq
    %v579 = vshrl.u32 %v578, 7
    %v580 = vsub.s32 0, %v579
    %v581 = vrot.slane %v566, %v580
    %v582 = vsel %vm577, %v581, -1e+30
    %v583 = vmax.f32 %v582, -1e+30
    %584 = vset.pattern.permute.xlu0 1
    %585 = vperm.xlu0 %584, %v573
    %v586 = vpop.permute.xlu0 %585
    %vm587 = vcmp.eq.s32.totalorder %v586, 1
    %v588 = vlaneseq
    %v589 = vshrl.u32 %v588, 7
    %v590 = vsub.s32 1, %v589
    %v591 = vrot.slane %v566, %v590
    %v592 = vsel %vm587, %v591, -1e+30
    %v593 = vmax.f32 %v583, %v592
    %594 = vset.pattern.permute.xlu0 2
    %595 = vperm.xlu0 %594, %v573
    %v596 = vpop.permute.xlu0 %595
    %vm597 = vcmp.eq.s32.totalorder %v596, 1
    %v598 = vlaneseq
    %v599 = vshrl.u32 %v598, 7
    %v600 = vsub.s32 2, %v599
    %v601 = vrot.slane %v566, %v600
    %v602 = vsel %vm597, %v601, -1e+30
    %v603 = vmax.f32 %v593, %v602
    %604 = vset.pattern.permute.xlu0 3
    %605 = vperm.xlu0 %604, %v573
    %v606 = vpop.permute.xlu0 %605
    %vm607 = vcmp.eq.s32.totalorder %v606, 1
    %v608 = vlaneseq
    %v609 = vshrl.u32 %v608, 7
    %v610 = vsub.s32 3, %v609
    %v611 = vrot.slane %v566, %v610
    %v612 = vsel %vm607, %v611, -1e+30
    %v613 = vmax.f32 %v603, %v612
    %614 = vset.pattern.permute.xlu0 4
    %615 = vperm.xlu0 %614, %v573
    %v616 = vpop.permute.xlu0 %615
    %vm617 = vcmp.eq.s32.totalorder %v616, 1
    %v618 = vlaneseq
    %v619 = vshrl.u32 %v618, 7
    %v620 = vsub.s32 4, %v619
    %v621 = vrot.slane %v566, %v620
    %v622 = vsel %vm617, %v621, -1e+30
    %v623 = vmax.f32 %v613, %v622
    %624 = vset.pattern.permute.xlu0 5
    %625 = vperm.xlu0 %624, %v573
    %v626 = vpop.permute.xlu0 %625
    %vm627 = vcmp.eq.s32.totalorder %v626, 1
    %v628 = vlaneseq
    %v629 = vshrl.u32 %v628, 7
    %v630 = vsub.s32 5, %v629
    %v631 = vrot.slane %v566, %v630
    %v632 = vsel %vm627, %v631, -1e+30
    %v633 = vmax.f32 %v623, %v632
    %634 = vset.pattern.permute.xlu0 6
    %635 = vperm.xlu0 %634, %v573
    %v636 = vpop.permute.xlu0 %635
    %vm637 = vcmp.eq.s32.totalorder %v636, 1
    %v638 = vlaneseq
    %v639 = vshrl.u32 %v638, 7
    %v640 = vsub.s32 6, %v639
    %v641 = vrot.slane %v566, %v640
    %v642 = vsel %vm637, %v641, -1e+30
    %v643 = vmax.f32 %v633, %v642
    %644 = vset.pattern.permute.xlu0 7
    %645 = vperm.xlu0 %644, %v573
    %v646 = vpop.permute.xlu0 %645
    %vm647 = vcmp.eq.s32.totalorder %v646, 1
    %v648 = vlaneseq
    %v649 = vshrl.u32 %v648, 7
    %v650 = vsub.s32 7, %v649
    %v651 = vrot.slane %v566, %v650
    %v652 = vsel %vm647, %v651, -1e+30
    %v653 = vmax.f32 %v643, %v652
    %654 = vset.pattern.permute.xlu0 8
    %655 = vperm.xlu0 %654, %v573
    %v656 = vpop.permute.xlu0 %655
    %vm657 = vcmp.eq.s32.totalorder %v656, 1
    %v658 = vlaneseq
    %v659 = vshrl.u32 %v658, 7
    %v660 = vsub.s32 0, %v659
    %v661 = vrot.slane %v567, %v660
    %v662 = vsel %vm657, %v661, -1e+30
    %v663 = vmax.f32 %v653, %v662
    %664 = vset.pattern.permute.xlu0 9
    %665 = vperm.xlu0 %664, %v573
    %v666 = vpop.permute.xlu0 %665
    %vm667 = vcmp.eq.s32.totalorder %v666, 1
    %v668 = vlaneseq
    %v669 = vshrl.u32 %v668, 7
    %v670 = vsub.s32 1, %v669
    %v671 = vrot.slane %v567, %v670
    %v672 = vsel %vm667, %v671, -1e+30
    %v673 = vmax.f32 %v663, %v672
    %674 = vset.pattern.permute.xlu0 10
    %675 = vperm.xlu0 %674, %v573
    %v676 = vpop.permute.xlu0 %675
    %vm677 = vcmp.eq.s32.totalorder %v676, 1
    %v678 = vlaneseq
    %v679 = vshrl.u32 %v678, 7
    %v680 = vsub.s32 2, %v679
    %v681 = vrot.slane %v567, %v680
    %v682 = vsel %vm677, %v681, -1e+30
    %v683 = vmax.f32 %v673, %v682
    %684 = vset.pattern.permute.xlu0 11
    %685 = vperm.xlu0 %684, %v573
    %v686 = vpop.permute.xlu0 %685
    %vm687 = vcmp.eq.s32.totalorder %v686, 1
    %v688 = vlaneseq
    %v689 = vshrl.u32 %v688, 7
    %v690 = vsub.s32 3, %v689
    %v691 = vrot.slane %v567, %v690
    %v692 = vsel %vm687, %v691, -1e+30
    %v693 = vmax.f32 %v683, %v692
    %694 = vset.pattern.permute.xlu0 12
    %695 = vperm.xlu0 %694, %v573
    %v696 = vpop.permute.xlu0 %695
    %vm697 = vcmp.eq.s32.totalorder %v696, 1
    %v698 = vlaneseq
    %v699 = vshrl.u32 %v698, 7
    %v700 = vsub.s32 4, %v699
    %v701 = vrot.slane %v567, %v700
    %v702 = vsel %vm697, %v701, -1e+30
    %v703 = vmax.f32 %v693, %v702
    %704 = vset.pattern.permute.xlu0 13
    %705 = vperm.xlu0 %704, %v573
    %v706 = vpop.permute.xlu0 %705
    %vm707 = vcmp.eq.s32.totalorder %v706, 1
    %v708 = vlaneseq
    %v709 = vshrl.u32 %v708, 7
    %v710 = vsub.s32 5, %v709
    %v711 = vrot.slane %v567, %v710
    %v712 = vsel %vm707, %v711, -1e+30
    %v713 = vmax.f32 %v703, %v712
    %714 = vset.pattern.permute.xlu0 14
    %715 = vperm.xlu0 %714, %v573
    %v716 = vpop.permute.xlu0 %715
    %vm717 = vcmp.eq.s32.totalorder %v716, 1
    %v718 = vlaneseq
    %v719 = vshrl.u32 %v718, 7
    %v720 = vsub.s32 6, %v719
    %v721 = vrot.slane %v567, %v720
    %v722 = vsel %vm717, %v721, -1e+30
    %v723 = vmax.f32 %v713, %v722
    %724 = vset.pattern.permute.xlu0 15
    %725 = vperm.xlu0 %724, %v573
    %v726 = vpop.permute.xlu0 %725
    %vm727 = vcmp.eq.s32.totalorder %v726, 1
    %v728 = vlaneseq
    %v729 = vshrl.u32 %v728, 7
    %v730 = vsub.s32 7, %v729
    %v731 = vrot.slane %v567, %v730
    %v732 = vsel %vm727, %v731, -1e+30
    %v733 = vmax.f32 %v723, %v732
    %vm734 = vcmp.gt.f32.partialorder %v571, 0.0
    %v735 = vsel %vm734, 1, 0
    %vm736 = vcmp.eq.s32.totalorder %v735, 1
    %v737 = vsel %vm736, %v733, 0.0
    %v738 = vpack.c.bf16 %v737, %v737
    %v739 = vld [vmem:[#allocation2 + $0x100] sm:$0xf]
    %v740 = vld [vmem:[#allocation2 + $0x104] sm:$0xf]
    %v741 = vld [vmem:[#allocation2 + $0x108] sm:$0xf]
    %v742 = vld [vmem:[#allocation2 + $0x10c] sm:$0xf]
    %v743 = vld [vmem:[#allocation2 + $0x110] sm:$0xf]
    %v744 = vld [vmem:[#allocation2 + $0x114] sm:$0xf]
    %v745 = vld [vmem:[#allocation2 + $0x118] sm:$0xf]
    %v746 = vld [vmem:[#allocation2 + $0x11c] sm:$0xf]
    %v747 = vld [vmem:[#allocation2 + $0x120] sm:$0xf]
    %v748 = vld [vmem:[#allocation2 + $0x124] sm:$0xf]
    %v749 = vld [vmem:[#allocation2 + $0x128] sm:$0xf]
    %v750 = vld [vmem:[#allocation2 + $0x12c] sm:$0xf]
    %v751 = vld [vmem:[#allocation2 + $0x130] sm:$0xf]
    %v752 = vld [vmem:[#allocation2 + $0x134] sm:$0xf]
    %v753 = vld [vmem:[#allocation2 + $0x138] sm:$0xf]
    %v754 = vld [vmem:[#allocation2 + $0x13c] sm:$0xf]
    %v755 = vld [vmem:[%s4 + $0x2] sm:$0x1]
    %v756 = vlaneseq
    %v757 = vshrl.u32 %v756, 7
    %v758 = vsub.s32 0, %v757
    %v759 = vrot.slane %v755, %v758
    %v776 = vunpack.c.l.b16 %v739
    %v777 = vunpack.c.l.b16 %v740
    %v778 = vunpack.c.l.b16 %v741
    %v779 = vunpack.c.l.b16 %v742
    %v780 = vunpack.c.l.b16 %v743
    %v781 = vunpack.c.l.b16 %v744
    %v782 = vunpack.c.l.b16 %v745
    %v783 = vunpack.c.l.b16 %v746
    %v784 = vunpack.c.l.b16 %v747
    %v785 = vunpack.c.l.b16 %v748
    %v786 = vunpack.c.l.b16 %v749
    %v787 = vunpack.c.l.b16 %v750
    %v788 = vunpack.c.l.b16 %v751
    %v789 = vunpack.c.l.b16 %v752
    %v790 = vunpack.c.l.b16 %v753
    %v791 = vunpack.c.l.b16 %v754
    %v792 = vpack.c.b16 %v777, %v776
    %v793 = vpack.c.b16 %v779, %v778
    %v794 = vpack.c.b16 %v781, %v780
    %v795 = vpack.c.b16 %v783, %v782
    %v796 = vpack.c.b16 %v785, %v784
    %v797 = vpack.c.b16 %v787, %v786
    %v798 = vpack.c.b16 %v789, %v788
    %v799 = vpack.c.b16 %v791, %v790
    %808 = vmatprep.subr.bf16.mxu0 0
    %809 = vmatpush1.bf16.msra.mxu0 %v792
    %810 = vmatprep.subr.bf16.mxu0 0
    %811 = vmatpush1.bf16.msra.mxu0 %v793
    %812 = vmatprep.subr.bf16.mxu0 0
    %813 = vmatpush1.bf16.msra.mxu0 %v794
    %814 = vmatprep.subr.bf16.mxu0 0
    %815 = vmatpush1.bf16.msra.mxu0 %v795
    %816 = vmatprep.subr.bf16.mxu0 0
    %817 = vmatpush1.bf16.msra.mxu0 %v796
    %818 = vmatprep.subr.bf16.mxu0 0
    %819 = vmatpush1.bf16.msra.mxu0 %v797
    %820 = vmatprep.subr.bf16.mxu0 0
    %821 = vmatpush1.bf16.msra.mxu0 %v798
    %822 = vmatprep.subr.bf16.mxu0 0
    %823 = vmatpush1.bf16.msra.mxu0 %v799
    %824 = vmatprep.subr.bf16.mxu0 0
    %825 = vmatpush1.bf16.msra.mxu0 0
    %826 = vmatprep.subr.bf16.mxu0 0
    %827 = vmatpush1.bf16.msra.mxu0 0
    %828 = vmatprep.subr.bf16.mxu0 0
    %829 = vmatpush1.bf16.msra.mxu0 0
    %830 = vmatprep.subr.bf16.mxu0 0
    %831 = vmatpush1.bf16.msra.mxu0 0
    %832 = vmatprep.subr.bf16.mxu0 0
    %833 = vmatpush1.bf16.msra.mxu0 0
    %834 = vmatprep.subr.bf16.mxu0 0
    %835 = vmatpush1.bf16.msra.mxu0 0
    %836 = vmatprep.subr.bf16.mxu0 0
    %837 = vmatpush1.bf16.msra.mxu0 0
    %838 = vmatprep.subr.bf16.mxu0 0
    %839 = vmatpush1.bf16.msra.mxu0 0
    %840 = vmatprep.mubr.bf16.mxu0 0
    %841 = vmatmul.mubr.bf16.gmra.mrb[0].mxu0 %v738
    %v842 = vpop.f32.mrb[0].mxu0
    %v843 = vadd.f32 %v759, %v842
    %v844 = vpop.f32.mrb[0].mxu0
    %v845 = vpop.f32.mrb[0].mxu0
    %v846 = vpop.f32.mrb[0].mxu0
    %847 = vdwg.mxu0
    %vm848 = vcmp.gt.f32.partialorder %v843, 0.0
    %v849 = vmul.f32 %v843, 0.01
    %v850 = vsel %vm848, %v843, %v849
    %v851 = vpack.c.bf16 %v850, %v850
    %v852 = vld [vmem:[#allocation2 + $0x140] sm:$0xf]
    %v853 = vld [vmem:[#allocation2 + $0x144] sm:$0xf]
    %v854 = vld [vmem:[#allocation2 + $0x148] sm:$0xf]
    %v855 = vld [vmem:[#allocation2 + $0x14c] sm:$0xf]
    %v856 = vld [vmem:[#allocation2 + $0x150] sm:$0xf]
    %v857 = vld [vmem:[#allocation2 + $0x154] sm:$0xf]
    %v858 = vld [vmem:[#allocation2 + $0x158] sm:$0xf]
    %v859 = vld [vmem:[#allocation2 + $0x15c] sm:$0xf]
    %v860 = vld [vmem:[#allocation2 + $0x160] sm:$0xf]
    %v861 = vld [vmem:[#allocation2 + $0x164] sm:$0xf]
    %v862 = vld [vmem:[#allocation2 + $0x168] sm:$0xf]
    %v863 = vld [vmem:[#allocation2 + $0x16c] sm:$0xf]
    %v864 = vld [vmem:[#allocation2 + $0x170] sm:$0xf]
    %v865 = vld [vmem:[#allocation2 + $0x174] sm:$0xf]
    %v866 = vld [vmem:[#allocation2 + $0x178] sm:$0xf]
    %v867 = vld [vmem:[#allocation2 + $0x17c] sm:$0xf]
    %v868 = vld [vmem:[%s4 + $0x3] sm:$0x1]
    %v869 = vlaneseq
    %v870 = vshrl.u32 %v869, 7
    %v871 = vsub.s32 0, %v870
    %v872 = vrot.slane %v868, %v871
    %v889 = vunpack.c.l.b16 %v852
    %v890 = vunpack.c.l.b16 %v853
    %v891 = vunpack.c.l.b16 %v854
    %v892 = vunpack.c.l.b16 %v855
    %v893 = vunpack.c.l.b16 %v856
    %v894 = vunpack.c.l.b16 %v857
    %v895 = vunpack.c.l.b16 %v858
    %v896 = vunpack.c.l.b16 %v859
    %v897 = vunpack.c.l.b16 %v860
    %v898 = vunpack.c.l.b16 %v861
    %v899 = vunpack.c.l.b16 %v862
    %v900 = vunpack.c.l.b16 %v863
    %v901 = vunpack.c.l.b16 %v864
    %v902 = vunpack.c.l.b16 %v865
    %v903 = vunpack.c.l.b16 %v866
    %v904 = vunpack.c.l.b16 %v867
    %v905 = vpack.c.b16 %v890, %v889
    %v906 = vpack.c.b16 %v892, %v891
    %v907 = vpack.c.b16 %v894, %v893
    %v908 = vpack.c.b16 %v896, %v895
    %v909 = vpack.c.b16 %v898, %v897
    %v910 = vpack.c.b16 %v900, %v899
    %v911 = vpack.c.b16 %v902, %v901
    %v912 = vpack.c.b16 %v904, %v903
    %921 = vmatprep.subr.bf16.mxu0 0
    %922 = vmatpush1.bf16.msra.mxu0 %v905
    %923 = vmatprep.subr.bf16.mxu0 0
    %924 = vmatpush1.bf16.msra.mxu0 %v906
    %925 = vmatprep.subr.bf16.mxu0 0
    %926 = vmatpush1.bf16.msra.mxu0 %v907
    %927 = vmatprep.subr.bf16.mxu0 0
    %928 = vmatpush1.bf16.msra.mxu0 %v908
    %929 = vmatprep.subr.bf16.mxu0 0
    %930 = vmatpush1.bf16.msra.mxu0 %v909
    %931 = vmatprep.subr.bf16.mxu0 0
    %932 = vmatpush1.bf16.msra.mxu0 %v910
    %933 = vmatprep.subr.bf16.mxu0 0
    %934 = vmatpush1.bf16.msra.mxu0 %v911
    %935 = vmatprep.subr.bf16.mxu0 0
    %936 = vmatpush1.bf16.msra.mxu0 %v912
    %937 = vmatprep.subr.bf16.mxu0 0
    %938 = vmatpush1.bf16.msra.mxu0 0
    %939 = vmatprep.subr.bf16.mxu0 0
    %940 = vmatpush1.bf16.msra.mxu0 0
    %941 = vmatprep.subr.bf16.mxu0 0
    %942 = vmatpush1.bf16.msra.mxu0 0
    %943 = vmatprep.subr.bf16.mxu0 0
    %944 = vmatpush1.bf16.msra.mxu0 0
    %945 = vmatprep.subr.bf16.mxu0 0
    %946 = vmatpush1.bf16.msra.mxu0 0
    %947 = vmatprep.subr.bf16.mxu0 0
    %948 = vmatpush1.bf16.msra.mxu0 0
    %949 = vmatprep.subr.bf16.mxu0 0
    %950 = vmatpush1.bf16.msra.mxu0 0
    %951 = vmatprep.subr.bf16.mxu0 0
    %952 = vmatpush1.bf16.msra.mxu0 0
    %953 = vmatprep.mubr.bf16.mxu0 0
    %954 = vmatmul.mubr.bf16.gmra.mrb[0].mxu0 %v851
    %v955 = vpop.f32.mrb[0].mxu0
    %v956 = vadd.f32 %v872, %v955
    %v957 = vpop.f32.mrb[0].mxu0
    %v958 = vpop.f32.mrb[0].mxu0
    %v959 = vpop.f32.mrb[0].mxu0
    %960 = vdwg.mxu0
    %v961 = vtanh.pop %v956
    %962 = vst [vmem:[#allocation5] sm:$0xff] %v961
    // Predicated region
    $region26: #{vagnn_forward.1} parent=1 // pred_check
      _
    $region27: #{vagnn_forward.1} parent=1 // pred_check_branch
      %964 = sbr.rel (0) target = $region29
    $region28: #{vagnn_forward.1} parent=1 // pred_region
      %s966 = ssub.s32 128, 128
      %967 = vsyncadd [#allocation4], %s966
      %s969 = sshll.u32 [#allocation5], 4
      %s970 = int_to_ptr.vmem [resolvable:$true] %s969
      %972 = dma.vmem_to_hbm [thread:$0]  %s970, 128, %s5, [#allocation4]
    $region29: #{vagnn_forward.1} parent=1 // pred_fallthru
      _
    // Predicated region
    $region30: #{vagnn_forward.1} parent=1 // pred_check
      _
    $region31: #{vagnn_forward.1} parent=1 // pred_check_branch
      %974 = sbr.rel (0) target = $region33
    $region32: #{vagnn_forward.1} parent=1 // pred_region
      %975 = dma.done [#allocation4], 128
    $region33: #{vagnn_forward.1} parent=1 // pred_fallthru
      _
    %976 = vsyncpa [#allocation3], 1
    %977 = vsyncpa [#allocation4], 1

</llo_original>
